<compile_context>
chip_gen: v6e
topology: v6e:2x2x1
jax: 0.10.0
libtpu: 0.0.40
codegen_flags: <defaults>
</compile_context>

<pallas_src>
import functools

import jax
import jax.numpy as jnp
from jax import lax
from jax.experimental import pallas as pl
from jax.experimental.pallas import tpu as pltpu


def _round_up(a: int, m: int) -> int:
    return ((a + m - 1) // m) * m


def _rbf_kernel(xT_ref, cs_ref, bias_ref, nis_ref, w_ref, o_ref, *, chunk, unroll):
    """One batch tile.

    xT_ref:   (input_dim, TB)           f32  batch on the 128-lane axis
    cs_ref:   (num_kernels, input_dim)  f32  2 * exp(-2*log_sigma) * centers
    bias_ref: (num_kernels, 1)          f32  -exp(-2*log_sigma) * |center|^2
    nis_ref:  (num_kernels, 1)          f32  -exp(-2*log_sigma)
    w_ref:    (output_dim, num_kernels) f32  nn.Linear weight (out, in)
    o_ref:    (TB, output_dim)               batch-major output (no XLA transpose after)
    """
    cs = cs_ref[...]
    bias = bias_ref[...]
    nis = nis_ref[...]
    w = w_ref[...]
    tb = xT_ref.shape[1]
    n_chunks = tb // chunk

    def body(ci, carry):
        start = pl.multiple_of(ci * chunk, chunk)
        xc = xT_ref[:, pl.ds(start, chunk)]                       # (D, C) lane-dense
        # |x_b|^2 per batch column (tiny D, VPU).
        x2 = jnp.sum(xc * xc, axis=0, keepdims=True)              # (1, C)
        # Cross term (2*inv_sig2 * c_k) . x_b on the otherwise-idle MXU.
        cross = jnp.dot(cs, xc, preferred_element_type=jnp.float32)   # (K, C)
        # Gaussian basis, expanded & sigma-folded: exp(-inv_sig2 * |x - c|^2).
        # TODO(synk): other entries of basis_func_dict (multiquadric, inverse
        #             quadratic, ...) would replace this exp.
        phi = jnp.exp(cross + bias + nis * x2)                    # (K, C)
        # Linear layer (bias=False); contract the kernel axis of phi so the
        # result comes out batch-major (C, output_dim) -> lane width 24 == full
        # extent of the output block, no wrapper-side transpose needed.
        out_c = lax.dot_general(phi, w, (((0,), (1,)), ((), ())),
                                preferred_element_type=jnp.float32)    # (C, O)
        o_ref[pl.ds(start, chunk), :] = out_c.astype(o_ref.dtype)
        return carry

    lax.fori_loop(0, n_chunks, body, 0, unroll=unroll)


def simple_rbf_forward(x, centers, log_sigmas, w_linear,
                       num_points_per_traj, n_out_labels, *, tile_b=16384):
    """Forward pass of SimpleRBF.

    x:          (B, input_dim)
    centers:    (num_kernels, input_dim)
    log_sigmas: (num_kernels,)
    w_linear:   (output_dim, num_kernels)   -- PyTorch nn.Linear weight layout
    Returns trajectory of shape (B, num_points_per_traj, n_out_labels).
    """
    B, input_dim = x.shape
    num_kernels, cdim = centers.shape
    output_dim = w_linear.shape[0]
    assert cdim == input_dim
    assert w_linear.shape[1] == num_kernels
    assert output_dim == num_points_per_traj * n_out_labels

    lane = 128
    # Balanced batch tiling: just enough tiles for tile_b, minimal padding,
    # and >= 2 grid steps when the batch is big enough so both v7x TensorCores
    # get work (no-op on single-TC v5e/v6e).
    nt = max(1, -(-B // tile_b))
    if B >= 2 * lane:
        nt = max(nt, 2)
    TB = _round_up(max(1, -(-B // nt)), lane)
    B_pad = nt * TB

    # Strip-mining chunk: a 128-multiple divisor of TB (<= 512 lanes so all
    # per-chunk intermediates stay within the 64-vreg file).
    if TB % 512 == 0:
        chunk = 512
    elif TB % 256 == 0:
        chunk = 256
    else:
        chunk = 128
    n_chunks = TB // chunk
    unroll = min(n_chunks, 8)

    # Sigma-folded RBF parameters (precomputed once in the wrapper).
    c32 = centers.astype(jnp.float32)
    ls = log_sigmas.astype(jnp.float32).reshape(num_kernels, 1)
    inv_sig2 = jnp.exp(-2.0 * ls)                                   # (K, 1)
    c_scaled = 2.0 * inv_sig2 * c32                                 # (K, D)
    bias = -inv_sig2 * jnp.sum(c32 * c32, axis=1, keepdims=True)    # (K, 1)
    neg_inv_sig2 = -inv_sig2                                        # (K, 1)

    # Lane-dense transposed activations (batch on lanes); pad only the small
    # tail required by the balanced tiling.
    # TODO(synk): the remaining wrapper-side x transpose/pad (~16 B/elem) could
    #             be removed by transposing (TB, D) tiles in-kernel on the XLU.
    xT = x.T.astype(jnp.float32)
    if B_pad != B:
        xT = jnp.pad(xT, ((0, 0), (0, B_pad - B)))

    # VMEM budget from the actual double-buffered blocks (+ margin), capped for
    # v7x's 64 MiB VMEM.
    in_block = _round_up(input_dim, 8) * TB * 4
    out_block = TB * _round_up(output_dim, lane) * 4
    vmem_bytes = 2 * (in_block + out_block) + (4 << 20)
    vmem_bytes = int(min(max(vmem_bytes, 16 << 20), 48 << 20))

    cost = pl.CostEstimate(
        flops=int(B_pad * (2 * num_kernels * input_dim + 3 * input_dim
                           + 3 * num_kernels + 2 * output_dim * num_kernels)),
        transcendentals=int(B_pad * num_kernels),
        bytes_accessed=int(4 * (B_pad * input_dim + B_pad * output_dim
                                + num_kernels * (input_dim + 2)
                                + output_dim * num_kernels)),
    )

    kernel = functools.partial(_rbf_kernel, chunk=chunk, unroll=unroll)

    out = pl.pallas_call(
        kernel,
        out_shape=jax.ShapeDtypeStruct((B_pad, output_dim), x.dtype),
        grid_spec=pltpu.PrefetchScalarGridSpec(
            num_scalar_prefetch=0,
            grid=(nt,),
            in_specs=[
                # batch-tiled, lane-dense activations
                pl.BlockSpec((input_dim, TB), lambda i: (0, i)),
                # parameters: constant index_map -> VMEM-resident across tiles
                pl.BlockSpec((num_kernels, input_dim), lambda i: (0, 0)),
                pl.BlockSpec((num_kernels, 1), lambda i: (0, 0)),
                pl.BlockSpec((num_kernels, 1), lambda i: (0, 0)),
                pl.BlockSpec((output_dim, num_kernels), lambda i: (0, 0)),
            ],
            out_specs=pl.BlockSpec((TB, output_dim), lambda i: (i, 0)),
        ),
        compiler_params=pltpu.CompilerParams(
            dimension_semantics=("parallel",),
            vmem_limit_bytes=vmem_bytes,
        ),
        cost_estimate=cost,
    )(xT, c_scaled, bias, neg_inv_sig2, w_linear.astype(jnp.float32))

    # pred_to_trajectory: slice off the padded tail, contiguous reshape (free).
    return out[:B].reshape(-1, num_points_per_traj, n_out_labels)


def _reference(x, centers, log_sigmas, w_linear, num_points_per_traj, n_out_labels):
    """Pure-JAX reference with the exact PyTorch RBF formulation."""
    diff = x[:, None, :] - centers[None, :, :]                  # (B, K, D)
    dist = jnp.sqrt(jnp.sum(diff * diff, axis=-1))              # (B, K)
    alpha = dist / jnp.exp(log_sigmas)[None, :]
    phi = jnp.exp(-(alpha * alpha))                             # gaussian basis
    return (phi @ w_linear.T).reshape(-1, num_points_per_traj, n_out_labels)


if __name__ == "__main__":
    # Small deterministic configuration consistent with the module.
    input_labels = ["x", "y", "vx", "vy"]              # input_dim = 4
    output_labels = ["x", "y", "theta"]                # n_out_labels = 3
    num_points_per_traj = 8
    num_kernels = 32

    input_dim = len(input_labels)
    n_out_labels = len(output_labels)
    output_dim = n_out_labels * num_points_per_traj    # 24

    key = jax.random.PRNGKey(0)
    kx, kc, ks, kw = jax.random.split(key, 4)

    centers = jax.random.normal(kc, (num_kernels, input_dim), dtype=jnp.float32)
    log_sigmas = 0.1 * jax.random.normal(ks, (num_kernels,), dtype=jnp.float32)
    bound = 1.0 / (num_kernels ** 0.5)
    w_linear = jax.random.uniform(kw, (output_dim, num_kernels),
                                  minval=-bound, maxval=bound,
                                  dtype=jnp.float32)

    # (batch, tile_b override) cases: single tile, padded tail within one tile,
    # and a multi-tile grid with a non-128-multiple batch.
    cases = [(2, None), (130, None), (300, 128)]
    ok = True
    for batch, tb in cases:
        kxi = jax.random.fold_in(kx, batch)
        x = jax.random.normal(kxi, (batch, input_dim), dtype=jnp.float32)
        kwargs = {} if tb is None else {"tile_b": tb}
        traj = simple_rbf_forward(x, centers, log_sigmas, w_linear,
                                  num_points_per_traj, n_out_labels, **kwargs)
        traj = jax.block_until_ready(traj)
        ref = _reference(x, centers, log_sigmas, w_linear,
                         num_points_per_traj, n_out_labels)
        ok &= traj.shape == (batch, num_points_per_traj, n_out_labels)
        ok &= bool(jnp.allclose(traj, ref, atol=1e-4, rtol=1e-4))

    assert ok
    print("KERNEL_OK")
</pallas_src>

<mosaic_0001>
module attributes {stable_mosaic.version = 11 : i64} {
  func.func @_rbf_kernel(%arg0: i32, %arg1: memref<4x128xf32, #tpu.memory_space<vmem>>, %arg2: memref<32x4xf32, #tpu.memory_space<vmem>>, %arg3: memref<32x1xf32, #tpu.memory_space<vmem>>, %arg4: memref<32x1xf32, #tpu.memory_space<vmem>>, %arg5: memref<24x32xf32, #tpu.memory_space<vmem>>, %arg6: memref<128x24xf32, #tpu.memory_space<vmem>>) attributes {dimension_semantics = [#tpu.dimension_semantics<parallel>], iteration_bounds = array<i64: 1>, scalar_prefetch = 0 : i64, scratch_operands = 0 : i64, tpu.core_type = #tpu.core_type<tc>, window_params = [{transform_indices = @transform_0, window_bounds = array<i64: 4, 128>}, {pipeline_mode = #tpu.pipeline_mode<synchronous>, transform_indices = @transform_1, window_bounds = array<i64: 32, 4>}, {pipeline_mode = #tpu.pipeline_mode<synchronous>, transform_indices = @transform_2, window_bounds = array<i64: 32, 1>}, {pipeline_mode = #tpu.pipeline_mode<synchronous>, transform_indices = @transform_3, window_bounds = array<i64: 32, 1>}, {pipeline_mode = #tpu.pipeline_mode<synchronous>, transform_indices = @transform_4, window_bounds = array<i64: 24, 32>}, {transform_indices = @transform_5, window_bounds = array<i64: 128, 24>}]} {
    %c0 = arith.constant 0 : index
    %c0_0 = arith.constant 0 : index
    %0 = vector.load %arg2[%c0, %c0_0] : memref<32x4xf32, #tpu.memory_space<vmem>>, vector<32x4xf32>
    %c0_1 = arith.constant 0 : index
    %c0_2 = arith.constant 0 : index
    %1 = vector.load %arg3[%c0_1, %c0_2] : memref<32x1xf32, #tpu.memory_space<vmem>>, vector<32x1xf32>
    %c0_3 = arith.constant 0 : index
    %c0_4 = arith.constant 0 : index
    %2 = vector.load %arg4[%c0_3, %c0_4] : memref<32x1xf32, #tpu.memory_space<vmem>>, vector<32x1xf32>
    %c0_5 = arith.constant 0 : index
    %c0_6 = arith.constant 0 : index
    %3 = vector.load %arg5[%c0_5, %c0_6] : memref<24x32xf32, #tpu.memory_space<vmem>>, vector<24x32xf32>
    %c0_i32 = arith.constant 0 : i32
    %c128_i32 = arith.constant 128 : i32
    %4 = arith.muli %c0_i32, %c128_i32 : i32
    %5 = tpu.assume_multiple %4, 128 : i32
    %c0_7 = arith.constant 0 : index
    %6 = arith.index_cast %5 : i32 to index
    %7 = vector.load %arg1[%c0_7, %6] : memref<4x128xf32, #tpu.memory_space<vmem>>, vector<4x128xf32>
    %8 = arith.mulf %7, %7 : vector<4x128xf32>
    %cst = arith.constant dense<0.000000e+00> : vector<128xf32>
    %9 = vector.multi_reduction <add>, %8, %cst [0] : vector<4x128xf32> to vector<128xf32>
    %10 = vector.shape_cast %9 : vector<128xf32> to vector<1x128xf32>
    %cst_8 = arith.constant dense<0.000000e+00> : vector<32x128xf32>
    %11 = tpu.matmul %0, %7, %cst_8 {dimension_numbers = #tpu.dot_dimension_numbers<[1], [0], [0], [1], [0, 0, 1, 1], [], []>} : vector<32x4xf32>, vector<4x128xf32>, vector<32x128xf32> -> vector<32x128xf32>
    %12 = vector.broadcast %1 : vector<32x1xf32> to vector<32x128xf32>
    %13 = arith.addf %11, %12 : vector<32x128xf32>
    %14 = vector.broadcast %2 : vector<32x1xf32> to vector<32x128xf32>
    %15 = vector.broadcast %10 : vector<1x128xf32> to vector<32x128xf32>
    %16 = arith.mulf %14, %15 : vector<32x128xf32>
    %17 = arith.addf %13, %16 : vector<32x128xf32>
    %18 = math.exp %17 : vector<32x128xf32>
    %cst_9 = arith.constant dense<0.000000e+00> : vector<128x24xf32>
    %19 = tpu.matmul %18, %3, %cst_9 {dimension_numbers = #tpu.dot_dimension_numbers<[0], [1], [1], [0], [0, 1, 1, 0], [], []>} : vector<32x128xf32>, vector<24x32xf32>, vector<128x24xf32> -> vector<128x24xf32>
    %20 = arith.index_cast %5 : i32 to index
    %c0_10 = arith.constant 0 : index
    %21 = vector.load %arg6[%20, %c0_10] : memref<128x24xf32, #tpu.memory_space<vmem>>, vector<128x24xf32>
    tpu.vector_store %arg6[%20, %c0_10], %19 {strides = array<i32>} : memref<128x24xf32, #tpu.memory_space<vmem>>, vector<128x24xf32>,
    %c1_i32 = arith.constant 1 : i32
    return
  }
  func.func @transform_0(%arg0: i32) -> (i32, i32) {
    %c0_i32 = arith.constant 0 : i32
    %c0_i32_0 = arith.constant 0 : i32
    return %c0_i32, %arg0 : i32, i32
  }
  func.func @transform_1(%arg0: i32) -> (i32, i32) {
    %c0_i32 = arith.constant 0 : i32
    %c0_i32_0 = arith.constant 0 : i32
    %c0_i32_1 = arith.constant 0 : i32
    return %c0_i32, %c0_i32_0 : i32, i32
  }
  func.func @transform_2(%arg0: i32) -> (i32, i32) {
    %c0_i32 = arith.constant 0 : i32
    %c0_i32_0 = arith.constant 0 : i32
    %c0_i32_1 = arith.constant 0 : i32
    return %c0_i32, %c0_i32_0 : i32, i32
  }
  func.func @transform_3(%arg0: i32) -> (i32, i32) {
    %c0_i32 = arith.constant 0 : i32
    %c0_i32_0 = arith.constant 0 : i32
    %c0_i32_1 = arith.constant 0 : i32
    return %c0_i32, %c0_i32_0 : i32, i32
  }
  func.func @transform_4(%arg0: i32) -> (i32, i32) {
    %c0_i32 = arith.constant 0 : i32
    %c0_i32_0 = arith.constant 0 : i32
    %c0_i32_1 = arith.constant 0 : i32
    return %c0_i32, %c0_i32_0 : i32, i32
  }
  func.func @transform_5(%arg0: i32) -> (i32, i32) {
    %c0_i32 = arith.constant 0 : i32
    %c0_i32_0 = arith.constant 0 : i32
    return %arg0, %c0_i32 : i32, i32
  }
}

</mosaic_0001>

<llo_original>
// kernel: tpu_custom_call.1
$region0: #{tpu_custom_call.1}
  #allocation0 [shape = 'u32[]', space=smem, size = 0x4, offset = 0x4, fixed_abs, tag = 'smem constant byte address 0x4 - core index']
  #allocation1 [shape = 'u32[144,128]{1,0:T(1,128)}', space=vmem, size = 0x12000, scoped, tag = 'internal scratch']
  %s0 = inlined_call_operand.vmem [shape: f32[4,128], index: 0, kind: input, shape index: {}]
  %s1 = inlined_call_operand.vmem [shape: f32[32,4], index: 1, kind: input, shape index: {}]
  %s2 = inlined_call_operand.vmem [shape: f32[32,1], index: 2, kind: input, shape index: {}]
  %s3 = inlined_call_operand.vmem [shape: f32[32,1], index: 3, kind: input, shape index: {}]
  %s4 = inlined_call_operand.vmem [shape: f32[24,32], index: 4, kind: input, shape index: {}]
  %s5 = inlined_call_operand.vmem [shape: f32[128,24], index: 5, kind: output, shape index: {}]
  %s6 = sld [smem:[#allocation0]]
  $region30: #{tpu_custom_call.1} parent=0
    _
  %s8 = ssub.s32 1, %s6
  %s9 = scalar_select 0, %s8, %s6
  // Predicated region
  $region2: #{tpu_custom_call.1} parent=0 // pred_check
    _
  $region3: #{tpu_custom_call.1} parent=0 // pred_check_branch
    %11 = sbr.rel (0) target = $region5
  $region4: #{tpu_custom_call.1} parent=0 // pred_region
    _
  $region5: #{tpu_custom_call.1} parent=0 // pred_fallthru
    _
  // Predicated region
  $region6: #{tpu_custom_call.1} parent=0 // pred_check
    _
  $region7: #{tpu_custom_call.1} parent=0 // pred_check_branch
    %13 = sbr.rel (0) target = $region9
  $region8: #{tpu_custom_call.1} parent=0 // pred_region
    _
  $region9: #{tpu_custom_call.1} parent=0 // pred_fallthru
    _
  // Predicated region
  $region10: #{tpu_custom_call.1} parent=0 // pred_check
    _
  $region11: #{tpu_custom_call.1} parent=0 // pred_check_branch
    %15 = sbr.rel (0) target = $region13
  $region12: #{tpu_custom_call.1} parent=0 // pred_region
    _
  $region13: #{tpu_custom_call.1} parent=0 // pred_fallthru
    _
  // Predicated region
  $region14: #{tpu_custom_call.1} parent=0 // pred_check
    _
  $region15: #{tpu_custom_call.1} parent=0 // pred_check_branch
    %17 = sbr.rel (0) target = $region17
  $region16: #{tpu_custom_call.1} parent=0 // pred_region
    _
  $region17: #{tpu_custom_call.1} parent=0 // pred_fallthru
    _
  // Predicated region
  $region18: #{tpu_custom_call.1} parent=0 // pred_check
    _
  $region19: #{tpu_custom_call.1} parent=0 // pred_check_branch
    %19 = sbr.rel (0) target = $region21
  $region20: #{tpu_custom_call.1} parent=0 // pred_region
    _
  $region21: #{tpu_custom_call.1} parent=0 // pred_fallthru
    _
  %v20 = vld [vmem:[%s1] sm:$0xff]
  %v21 = vld [vmem:[%s1 + $0x8] sm:$0xff]
  %v22 = vld [vmem:[%s1 + $0x10] sm:$0xff]
  %v23 = vld [vmem:[%s1 + $0x18] sm:$0xff]
  %v24 = vld [vmem:[%s2] sm:$0xff]
  %v25 = vld [vmem:[%s2 + $0x8] sm:$0xff]
  %v26 = vld [vmem:[%s2 + $0x10] sm:$0xff]
  %v27 = vld [vmem:[%s2 + $0x18] sm:$0xff]
  %v28 = vld [vmem:[%s3] sm:$0xff]
  %v29 = vld [vmem:[%s3 + $0x8] sm:$0xff]
  %v30 = vld [vmem:[%s3 + $0x10] sm:$0xff]
  %v31 = vld [vmem:[%s3 + $0x18] sm:$0xff]
  %v32 = vld [vmem:[%s4] sm:$0xff]
  %v33 = vld [vmem:[%s4 + $0x8] sm:$0xff]
  %v34 = vld [vmem:[%s4 + $0x10] sm:$0xff]
  %v35 = vld [vmem:[%s0] sm:$0xf]
  %v36 = vmul.f32 %v35, %v35
  %vm37 = vcmask 1043456
  %v38 = vsel %vm37, %v36, 0.0
  %v39 = vrot.slane %v38, 4
  %v40 = vadd.f32 %v38, %v39
  %v41 = vrot.slane %v40, 2
  %v42 = vadd.f32 %v40, %v41
  %v43 = vrot.slane %v42, 1
  %v44 = vadd.f32 %v42, %v43
  %46 = vset.pattern.permute.xlu0 0
  %47 = vperm.xlu0 %46, %v24
  %v48 = vpop.permute.xlu0 %47
  %51 = vset.pattern.permute.xlu0 0
  %52 = vperm.xlu0 %51, %v25
  %v53 = vpop.permute.xlu0 %52
  %56 = vset.pattern.permute.xlu0 0
  %57 = vperm.xlu0 %56, %v26
  %v58 = vpop.permute.xlu0 %57
  %61 = vset.pattern.permute.xlu0 0
  %62 = vperm.xlu0 %61, %v27
  %v63 = vpop.permute.xlu0 %62
  %vm65 = vcmask 31744
  %v67 = vsel %vm65, %v20, 0
  %v70 = vsel %vm65, %v21, 0
  %v73 = vsel %vm65, %v22, 0
  %v76 = vsel %vm65, %v23, 0
  %v79 = vsel %vm37, %v35, 0
  %81 = vmatprep.subr.mxu0 0.0
  %82 = vmatpush1.msra.mxu0 0.0
  %83 = vmatprep.subr.mxu0 0.0
  %84 = vmatpush1.msra.mxu0 0.0
  %85 = vmatprep.subr.mxu0 0.0
  %86 = vmatpush1.msra.mxu0 0.0
  %87 = vmatprep.subr.mxu0 0.0
  %88 = vmatpush1.msra.mxu0 0.0
  %89 = vmatprep.subr.mxu0 0.0
  %90 = vmatpush1.msra.mxu0 0.0
  %91 = vmatprep.subr.mxu0 0.0
  %92 = vmatpush1.msra.mxu0 0.0
  %93 = vmatprep.subr.mxu0 0.0
  %94 = vmatpush1.msra.mxu0 0.0
  %95 = vmatprep.subr.mxu0 0.0
  %96 = vmatpush1.msra.mxu0 0.0
  %97 = vmatprep.subr.mxu0 0.0
  %98 = vmatpush1.msra.mxu0 0.0
  %99 = vmatprep.subr.mxu0 0.0
  %100 = vmatpush1.msra.mxu0 0.0
  %101 = vmatprep.subr.mxu0 0.0
  %102 = vmatpush1.msra.mxu0 0.0
  %103 = vmatprep.subr.mxu0 0.0
  %104 = vmatpush1.msra.mxu0 0.0
  %105 = vmatprep.subr.mxu0 0.0
  %106 = vmatpush1.msra.mxu0 0.0
  %107 = vmatprep.subr.mxu0 0.0
  %108 = vmatpush1.msra.mxu0 0.0
  %109 = vmatprep.subr.mxu0 0.0
  %110 = vmatpush1.msra.mxu0 0.0
  %111 = vmatprep.subr.mxu0 0.0
  %112 = vmatpush1.msra.mxu0 %v79
  %113 = vmatprep.subr.mxu0 0.0
  %114 = vmatpush2.msra.mxu0 0.0
  %115 = vmatprep.subr.mxu0 0.0
  %116 = vmatpush2.msra.mxu0 0.0
  %117 = vmatprep.subr.mxu0 0.0
  %118 = vmatpush2.msra.mxu0 0.0
  %119 = vmatprep.subr.mxu0 0.0
  %120 = vmatpush2.msra.mxu0 0.0
  %121 = vmatprep.subr.mxu0 0.0
  %122 = vmatpush2.msra.mxu0 0.0
  %123 = vmatprep.subr.mxu0 0.0
  %124 = vmatpush2.msra.mxu0 0.0
  %125 = vmatprep.subr.mxu0 0.0
  %126 = vmatpush2.msra.mxu0 0.0
  %127 = vmatprep.subr.mxu0 0.0
  %128 = vmatpush2.msra.mxu0 0.0
  %129 = vmatprep.subr.mxu0 0.0
  %130 = vmatpush2.msra.mxu0 0.0
  %131 = vmatprep.subr.mxu0 0.0
  %132 = vmatpush2.msra.mxu0 0.0
  %133 = vmatprep.subr.mxu0 0.0
  %134 = vmatpush2.msra.mxu0 0.0
  %135 = vmatprep.subr.mxu0 0.0
  %136 = vmatpush2.msra.mxu0 0.0
  %137 = vmatprep.subr.mxu0 0.0
  %138 = vmatpush2.msra.mxu0 0.0
  %139 = vmatprep.subr.mxu0 0.0
  %140 = vmatpush2.msra.mxu0 0.0
  %141 = vmatprep.subr.mxu0 0.0
  %142 = vmatpush2.msra.mxu0 0.0
  %143 = vmatprep.subr.mxu0 0.0
  %144 = vmatpush2.msra.mxu0 0.0
  %145 = vmatprep.mubr.f32.mxu0 0.0
  %146 = vmatmul.mubr.f32.gmra.mxu0 %v67
  %v147 = vpop.f32.mrf.mxu0
  %v148 = vadd.f32 %v48, %v147
  %v149 = vpop.f32.mrf.mxu0
  %150 = vmatprep.mubr.f32.mxu0 0.0
  %151 = vmatmul.mubr.f32.gmra.mxu0 %v70
  %v152 = vpop.f32.mrf.mxu0
  %v153 = vadd.f32 %v53, %v152
  %v154 = vpop.f32.mrf.mxu0
  %155 = vmatprep.mubr.f32.mxu0 0.0
  %156 = vmatmul.mubr.f32.gmra.mxu0 %v73
  %v157 = vpop.f32.mrf.mxu0
  %v158 = vadd.f32 %v58, %v157
  %v159 = vpop.f32.mrf.mxu0
  %160 = vmatprep.mubr.f32.mxu0 0.0
  %161 = vmatmul.mubr.f32.gmra.mxu0 %v76
  %v162 = vpop.f32.mrf.mxu0
  %v163 = vadd.f32 %v63, %v162
  %v164 = vpop.f32.mrf.mxu0
  %165 = vdwg.mxu0
  %167 = vset.pattern.permute.xlu0 0
  %168 = vperm.xlu0 %167, %v28
  %v169 = vpop.permute.xlu0 %168
  %172 = vset.pattern.permute.xlu0 0
  %173 = vperm.xlu0 %172, %v29
  %v174 = vpop.permute.xlu0 %173
  %177 = vset.pattern.permute.xlu0 0
  %178 = vperm.xlu0 %177, %v30
  %v179 = vpop.permute.xlu0 %178
  %182 = vset.pattern.permute.xlu0 0
  %183 = vperm.xlu0 %182, %v31
  %v184 = vpop.permute.xlu0 %183
  %v186 = vmul.f32 %v169, %v44
  %v187 = vmul.f32 %v174, %v44
  %v188 = vmul.f32 %v179, %v44
  %v189 = vmul.f32 %v184, %v44
  %v190 = vadd.f32 %v148, %v186
  %v191 = vadd.f32 %v153, %v187
  %v192 = vadd.f32 %v158, %v188
  %v193 = vadd.f32 %v163, %v189
  %v194 = vmul.f32 %v190, 1.442695
  %v195 = vpow.pop %v194
  %v196 = vmul.f32 %v191, 1.442695
  %v197 = vpow.pop %v196
  %v198 = vmul.f32 %v192, 1.442695
  %v199 = vpow.pop %v198
  %v200 = vmul.f32 %v193, 1.442695
  %v201 = vpow.pop %v200
  %202 = vxpose.xlu0.b32.start [1/16] %v195, 128
  %203 = vxpose.xlu0.b32.cont [2/16] %v197, 128
  %204 = vxpose.xlu0.b32.cont [3/16] %v199, 128
  %205 = vxpose.xlu0.b32.cont [4/16] %v201, 128
  %206 = vxpose.xlu0.b32.cont [5/16] 0.0, 128
  %207 = vxpose.xlu0.b32.cont [6/16] 0.0, 128
  %208 = vxpose.xlu0.b32.cont [7/16] 0.0, 128
  %209 = vxpose.xlu0.b32.cont [8/16] 0.0, 128
  %210 = vxpose.xlu0.b32.cont [9/16] 0.0, 128
  %211 = vxpose.xlu0.b32.cont [10/16] 0.0, 128
  %212 = vxpose.xlu0.b32.cont [11/16] 0.0, 128
  %213 = vxpose.xlu0.b32.cont [12/16] 0.0, 128
  %214 = vxpose.xlu0.b32.cont [13/16] 0.0, 128
  %215 = vxpose.xlu0.b32.cont [14/16] 0.0, 128
  %216 = vxpose.xlu0.b32.cont [15/16] 0.0, 128
  %217 = vxpose.xlu0.b32.end [16/16] 0.0, 128
  %v218 = vpop.trf.xlu0
  %v219 = vpop.trf.xlu0
  %v220 = vpop.trf.xlu0
  %v221 = vpop.trf.xlu0
  %v222 = vpop.trf.xlu0
  %v223 = vpop.trf.xlu0
  %v224 = vpop.trf.xlu0
  %v225 = vpop.trf.xlu0
  %v226 = vpop.trf.xlu0
  %v227 = vpop.trf.xlu0
  %v228 = vpop.trf.xlu0
  %v229 = vpop.trf.xlu0
  %v230 = vpop.trf.xlu0
  %v231 = vpop.trf.xlu0
  %v232 = vpop.trf.xlu0
  %v233 = vpop.trf.xlu0
  %vm234 = vcmask 261120
  %v236 = vsel %vm234, %v218, 0
  %v239 = vsel %vm234, %v219, 0
  %v242 = vsel %vm234, %v220, 0
  %v245 = vsel %vm234, %v221, 0
  %v248 = vsel %vm234, %v222, 0
  %v251 = vsel %vm234, %v223, 0
  %v254 = vsel %vm234, %v224, 0
  %v257 = vsel %vm234, %v225, 0
  %v260 = vsel %vm234, %v226, 0
  %v263 = vsel %vm234, %v227, 0
  %v266 = vsel %vm234, %v228, 0
  %v269 = vsel %vm234, %v229, 0
  %v272 = vsel %vm234, %v230, 0
  %v275 = vsel %vm234, %v231, 0
  %v278 = vsel %vm234, %v232, 0
  %v281 = vsel %vm234, %v233, 0
  %v284 = vsel %vm234, %v32, 0
  %v287 = vsel %vm234, %v33, 0
  %v290 = vsel %vm234, %v34, 0
  %292 = vmatprep.subr.mxu0 0.0
  %293 = vmatpush1.xpose.msra.mxu0 0.0
  %294 = vmatprep.subr.mxu0 0.0
  %295 = vmatpush1.xpose.msra.mxu0 0.0
  %296 = vmatprep.subr.mxu0 0.0
  %297 = vmatpush1.xpose.msra.mxu0 0.0
  %298 = vmatprep.subr.mxu0 0.0
  %299 = vmatpush1.xpose.msra.mxu0 0.0
  %300 = vmatprep.subr.mxu0 0.0
  %301 = vmatpush1.xpose.msra.mxu0 0.0
  %302 = vmatprep.subr.mxu0 0.0
  %303 = vmatpush1.xpose.msra.mxu0 0.0
  %304 = vmatprep.subr.mxu0 0.0
  %305 = vmatpush1.xpose.msra.mxu0 0.0
  %306 = vmatprep.subr.mxu0 0.0
  %307 = vmatpush1.xpose.msra.mxu0 0.0
  %308 = vmatprep.subr.mxu0 0.0
  %309 = vmatpush1.xpose.msra.mxu0 0.0
  %310 = vmatprep.subr.mxu0 0.0
  %311 = vmatpush1.xpose.msra.mxu0 0.0
  %312 = vmatprep.subr.mxu0 0.0
  %313 = vmatpush1.xpose.msra.mxu0 0.0
  %314 = vmatprep.subr.mxu0 0.0
  %315 = vmatpush1.xpose.msra.mxu0 0.0
  %316 = vmatprep.subr.mxu0 0.0
  %317 = vmatpush1.xpose.msra.mxu0 0.0
  %318 = vmatprep.subr.mxu0 0.0
  %319 = vmatpush1.xpose.msra.mxu0 %v290
  %320 = vmatprep.subr.mxu0 0.0
  %321 = vmatpush1.xpose.msra.mxu0 %v287
  %322 = vmatprep.subr.mxu0 0.0
  %323 = vmatpush1.xpose.msra.mxu0 %v284
  %324 = vmatprep.subr.mxu0 0.0
  %325 = vmatpush2.xpose.msra.mxu0 0.0
  %326 = vmatprep.subr.mxu0 0.0
  %327 = vmatpush2.xpose.msra.mxu0 0.0
  %328 = vmatprep.subr.mxu0 0.0
  %329 = vmatpush2.xpose.msra.mxu0 0.0
  %330 = vmatprep.subr.mxu0 0.0
  %331 = vmatpush2.xpose.msra.mxu0 0.0
  %332 = vmatprep.subr.mxu0 0.0
  %333 = vmatpush2.xpose.msra.mxu0 0.0
  %334 = vmatprep.subr.mxu0 0.0
  %335 = vmatpush2.xpose.msra.mxu0 0.0
  %336 = vmatprep.subr.mxu0 0.0
  %337 = vmatpush2.xpose.msra.mxu0 0.0
  %338 = vmatprep.subr.mxu0 0.0
  %339 = vmatpush2.xpose.msra.mxu0 0.0
  %340 = vmatprep.subr.mxu0 0.0
  %341 = vmatpush2.xpose.msra.mxu0 0.0
  %342 = vmatprep.subr.mxu0 0.0
  %343 = vmatpush2.xpose.msra.mxu0 0.0
  %344 = vmatprep.subr.mxu0 0.0
  %345 = vmatpush2.xpose.msra.mxu0 0.0
  %346 = vmatprep.subr.mxu0 0.0
  %347 = vmatpush2.xpose.msra.mxu0 0.0
  %348 = vmatprep.subr.mxu0 0.0
  %349 = vmatpush2.xpose.msra.mxu0 0.0
  %350 = vmatprep.subr.mxu0 0.0
  %351 = vmatpush2.xpose.msra.mxu0 0.0
  %352 = vmatprep.subr.mxu0 0.0
  %353 = vmatpush2.xpose.msra.mxu0 0.0
  %354 = vmatprep.subr.mxu0 0.0
  %355 = vmatpush2.xpose.msra.mxu0 0.0
  %356 = vmatprep.mubr.f32.mxu0 0.0
  %357 = vmatmul.mubr.f32.gmra.mxu0 %v236
  %v358 = vpop.f32.mrf.mxu0
  %v359 = vadd.f32 0.0, %v358
  %v360 = vpop.f32.mrf.mxu0
  %361 = vmatprep.mubr.f32.mxu0 0.0
  %362 = vmatmul.mubr.f32.gmra.mxu0 %v239
  %v363 = vpop.f32.mrf.mxu0
  %v364 = vadd.f32 0.0, %v363
  %v365 = vpop.f32.mrf.mxu0
  %366 = vmatprep.mubr.f32.mxu0 0.0
  %367 = vmatmul.mubr.f32.gmra.mxu0 %v242
  %v368 = vpop.f32.mrf.mxu0
  %v369 = vadd.f32 0.0, %v368
  %v370 = vpop.f32.mrf.mxu0
  %371 = vmatprep.mubr.f32.mxu0 0.0
  %372 = vmatmul.mubr.f32.gmra.mxu0 %v245
  %v373 = vpop.f32.mrf.mxu0
  %v374 = vadd.f32 0.0, %v373
  %v375 = vpop.f32.mrf.mxu0
  %376 = vmatprep.mubr.f32.mxu0 0.0
  %377 = vmatmul.mubr.f32.gmra.mxu0 %v248
  %v378 = vpop.f32.mrf.mxu0
  %v379 = vadd.f32 0.0, %v378
  %v380 = vpop.f32.mrf.mxu0
  %381 = vmatprep.mubr.f32.mxu0 0.0
  %382 = vmatmul.mubr.f32.gmra.mxu0 %v251
  %v383 = vpop.f32.mrf.mxu0
  %v384 = vadd.f32 0.0, %v383
  %v385 = vpop.f32.mrf.mxu0
  %386 = vmatprep.mubr.f32.mxu0 0.0
  %387 = vmatmul.mubr.f32.gmra.mxu0 %v254
  %v388 = vpop.f32.mrf.mxu0
  %v389 = vadd.f32 0.0, %v388
  %v390 = vpop.f32.mrf.mxu0
  %391 = vmatprep.mubr.f32.mxu0 0.0
  %392 = vmatmul.mubr.f32.gmra.mxu0 %v257
  %v393 = vpop.f32.mrf.mxu0
  %v394 = vadd.f32 0.0, %v393
  %v395 = vpop.f32.mrf.mxu0
  %396 = vmatprep.mubr.f32.mxu0 0.0
  %397 = vmatmul.mubr.f32.gmra.mxu0 %v260
  %v398 = vpop.f32.mrf.mxu0
  %v399 = vadd.f32 0.0, %v398
  %v400 = vpop.f32.mrf.mxu0
  %401 = vmatprep.mubr.f32.mxu0 0.0
  %402 = vmatmul.mubr.f32.gmra.mxu0 %v263
  %v403 = vpop.f32.mrf.mxu0
  %v404 = vadd.f32 0.0, %v403
  %v405 = vpop.f32.mrf.mxu0
  %406 = vmatprep.mubr.f32.mxu0 0.0
  %407 = vmatmul.mubr.f32.gmra.mxu0 %v266
  %v408 = vpop.f32.mrf.mxu0
  %v409 = vadd.f32 0.0, %v408
  %v410 = vpop.f32.mrf.mxu0
  %411 = vmatprep.mubr.f32.mxu0 0.0
  %412 = vmatmul.mubr.f32.gmra.mxu0 %v269
  %v413 = vpop.f32.mrf.mxu0
  %v414 = vadd.f32 0.0, %v413
  %v415 = vpop.f32.mrf.mxu0
  %416 = vmatprep.mubr.f32.mxu0 0.0
  %417 = vmatmul.mubr.f32.gmra.mxu0 %v272
  %v418 = vpop.f32.mrf.mxu0
  %v419 = vadd.f32 0.0, %v418
  %v420 = vpop.f32.mrf.mxu0
  %421 = vmatprep.mubr.f32.mxu0 0.0
  %422 = vmatmul.mubr.f32.gmra.mxu0 %v275
  %v423 = vpop.f32.mrf.mxu0
  %v424 = vadd.f32 0.0, %v423
  %v425 = vpop.f32.mrf.mxu0
  %426 = vmatprep.mubr.f32.mxu0 0.0
  %427 = vmatmul.mubr.f32.gmra.mxu0 %v278
  %v428 = vpop.f32.mrf.mxu0
  %v429 = vadd.f32 0.0, %v428
  %v430 = vpop.f32.mrf.mxu0
  %431 = vmatprep.mubr.f32.mxu0 0.0
  %432 = vmatmul.mubr.f32.gmra.mxu0 %v281
  %v433 = vpop.f32.mrf.mxu0
  %v434 = vadd.f32 0.0, %v433
  %v435 = vpop.f32.mrf.mxu0
  %436 = vdwg.mxu0
  %vm437 = vcmask 195584
  %438 = vst.msk [vmem:[%s5] sm:$0xff] %vm437, %v359
  %439 = vst.msk [vmem:[%s5 + $0x8] sm:$0xff] %vm437, %v364
  %440 = vst.msk [vmem:[%s5 + $0x10] sm:$0xff] %vm437, %v369
  %441 = vst.msk [vmem:[%s5 + $0x18] sm:$0xff] %vm437, %v374
  %442 = vst.msk [vmem:[%s5 + $0x20] sm:$0xff] %vm437, %v379
  %443 = vst.msk [vmem:[%s5 + $0x28] sm:$0xff] %vm437, %v384
  %444 = vst.msk [vmem:[%s5 + $0x30] sm:$0xff] %vm437, %v389
  %445 = vst.msk [vmem:[%s5 + $0x38] sm:$0xff] %vm437, %v394
  %446 = vst.msk [vmem:[%s5 + $0x40] sm:$0xff] %vm437, %v399
  %447 = vst.msk [vmem:[%s5 + $0x48] sm:$0xff] %vm437, %v404
  %448 = vst.msk [vmem:[%s5 + $0x50] sm:$0xff] %vm437, %v409
  %449 = vst.msk [vmem:[%s5 + $0x58] sm:$0xff] %vm437, %v414
  %450 = vst.msk [vmem:[%s5 + $0x60] sm:$0xff] %vm437, %v419
  %451 = vst.msk [vmem:[%s5 + $0x68] sm:$0xff] %vm437, %v424
  %452 = vst.msk [vmem:[%s5 + $0x70] sm:$0xff] %vm437, %v429
  %453 = vst.msk [vmem:[%s5 + $0x78] sm:$0xff] %vm437, %v434
  // Predicated region
  $region22: #{tpu_custom_call.1} parent=0 // pred_check
    _
  $region23: #{tpu_custom_call.1} parent=0 // pred_check_branch
    %455 = sbr.rel (0) target = $region25
  $region24: #{tpu_custom_call.1} parent=0 // pred_region
    _
  $region25: #{tpu_custom_call.1} parent=0 // pred_fallthru
    _
  // Predicated region
  $region26: #{tpu_custom_call.1} parent=0 // pred_check
    _
  $region27: #{tpu_custom_call.1} parent=0 // pred_check_branch
    %457 = sbr.rel (0) target = $region29
  $region28: #{tpu_custom_call.1} parent=0 // pred_region
    _
  $region29: #{tpu_custom_call.1} parent=0 // pred_fallthru
    _

</llo_original>
